<compile_context>
chip_gen: v7x
topology: tpu7x:2x2x1
jax: 0.10.0
libtpu: 0.0.40
codegen_flags: <defaults>
</compile_context>

<pallas_src>
import functools
import math

import jax
import jax.numpy as jnp
from jax import lax
from jax.experimental import pallas as pl
from jax.experimental.pallas import tpu as pltpu

DIM = 256       # model dim (last conv outputs 256 channels)
EMB = 8         # embedding width used by TransformerModel
N_BINS = 16     # digitize bins (embedding vocabulary)
N_FREQ = 8      # unused in forward (kept for config parity)
SEQ_LEN = 16    # curve length so the 3-conv stack ends at L_out == 1
BATCH = 2
K = 4           # Conv1d kernel size for all three convs
EMB_SCALE = math.sqrt(DIM)


def _rup8(n):
    return ((n + 7) // 8) * 8


def _conv1d(x, w, b, stride):
    """x: (N, C_in, L), w: (C_out, C_in, K) [PyTorch layout], b: (C_out,)."""
    y = lax.conv_general_dilated(
        x, w, window_strides=(stride,), padding="VALID",
        dimension_numbers=("NCH", "OIH", "NCH"))
    return y + b[None, :, None]


# ---------------- fused Pallas kernel factory ----------------

@functools.lru_cache(maxsize=None)
def _build_fused_forward(B, L):
    """Single fused pallas_call for given (batch, curve length)."""
    assert L == SEQ_LEN, "conv stack is sized for L == 16"
    LNB = L * N_BINS                                   # 256 (multi-hot width)

    # Pad batch to sublane multiple; one grid step handles BLOCK_B curves.
    Bp = max(_rup8(B), 8)
    BLOCK_B = Bp if Bp <= 512 else 512
    Bp = ((Bp + BLOCK_B - 1) // BLOCK_B) * BLOCK_B
    grid = (Bp // BLOCK_B,)

    def kernel(tgt_ref, tab_ref, w2_ref, bias_ref, o_ref):
        f32 = jnp.float32
        bf16 = jnp.bfloat16

        # Multi-hot selection matrix: row b has a 1 at lane l*N_BINS + bins[b,l]
        # for every curve position l (padded rows use target -1 -> all zero).
        lane = lax.broadcasted_iota(jnp.int32, (BLOCK_B, LNB), 1)
        hot = (lane == tgt_ref[...]).astype(bf16)      # (BLOCK_B, 256), exact 0/1

        b1 = bias_ref[:, 0:DIM]                        # (1, 256) f32
        b2 = bias_ref[:, DIM:2 * DIM]                  # (1, 256) f32

        # embedding*sqrt(dim) -> conv1 -> conv2 -> conv3 -> MLP Linear1
        # (all affine) pre-composed into tab; bf16 MXU feed, f32 accumulate.
        h = jnp.dot(hot, tab_ref[...], preferred_element_type=f32) + b1
        h = jnp.maximum(h, 0.0).astype(bf16)           # ReLU, then bf16 MXU feed
        y = jnp.dot(h, w2_ref[...], preferred_element_type=f32) + b2
        o_ref[...] = y                                 # full unmasked lane-dense store

    fused = pl.pallas_call(
        kernel,
        out_shape=jax.ShapeDtypeStruct((Bp, DIM), jnp.float32),
        grid=grid,
        in_specs=[
            pl.BlockSpec((BLOCK_B, LNB), lambda i: (i, 0)),   # per-curve targets
            pl.BlockSpec((LNB, DIM), lambda i: (0, 0)),       # folded table (bf16)
            pl.BlockSpec((DIM, DIM), lambda i: (0, 0)),       # MLP Linear2 (bf16)
            pl.BlockSpec((1, 2 * DIM), lambda i: (0, 0)),     # packed biases (f32)
        ],
        out_specs=pl.BlockSpec((BLOCK_B, DIM), lambda i: (i, 0)),
        compiler_params=pltpu.CompilerParams(
            dimension_semantics=("parallel",)),               # dual-TC on v7x
    )
    return fused, Bp


# ---------------- params ----------------

def init_params(key):
    ks = jax.random.split(key, 11)

    def lin(k, fan_in, shape):
        return jax.random.normal(k, shape, jnp.float32) / math.sqrt(fan_in)

    return {
        # TransformerModel: Embedding(n_bins, 8) + Conv1d(8,32,4,s=2)
        #                   + Conv1d(32,128,4) + Conv1d(128,256,4)
        "embedding": jax.random.normal(ks[0], (N_BINS, EMB), jnp.float32),
        "conv1_w": lin(ks[1], EMB * K, (32, EMB, K)),
        "conv1_b": lin(ks[2], EMB * K, (32,)),
        "conv2_w": lin(ks[3], 32 * K, (128, 32, K)),
        "conv2_b": lin(ks[4], 32 * K, (128,)),
        "conv3_w": lin(ks[5], 128 * K, (256, 128, K)),
        "conv3_b": lin(ks[6], 128 * K, (256,)),
        # mlp_shape_magnitude = MLPWrapper(dim, dim)
        "mlp_w1": lin(ks[7], DIM, (DIM, DIM)),
        "mlp_b1": lin(ks[8], DIM, (DIM,)),
        "mlp_w2": lin(ks[9], DIM, (DIM, DIM)),
        "mlp_b2": lin(ks[10], DIM, (DIM,)),
    }


def prepare_params(params):
    """One-time offline fold of the whole affine prefix into a lookup table.

    Everything between the (position, bin) input and the MLP ReLU is affine:
    embedding*sqrt(dim), the three Conv1d layers (no activation between them
    in the reference nn.Sequential), their biases, and the MLP's first Linear.
    So the map factors as  out_pre_relu = multi_hot @ tab + b1  where row
    l*N_BINS + v of `tab` is the contribution of bin v at curve position l.
    """
    f32 = jnp.float32
    L = SEQ_LEN
    n = L * N_BINS

    emb_s = params["embedding"].astype(f32) * EMB_SCALE             # (16, 8)

    # Basis inputs: one per (position l, bin v); basis[l*16+v, :, l] = emb_s[v].
    pos = jnp.arange(n) // N_BINS
    binv = jnp.arange(n) % N_BINS
    basis = jnp.zeros((n, EMB, L), f32).at[jnp.arange(n), :, pos].set(emb_s[binv])

    zb = lambda c: jnp.zeros((c,), f32)
    # Linear part (biases zeroed): per-(l, v) contribution to the conv output.
    t = _conv1d(basis, params["conv1_w"], zb(32), 2)
    t = _conv1d(t, params["conv2_w"], zb(128), 1)
    t = _conv1d(t, params["conv3_w"], zb(256), 1)                    # (n, 256, 1)
    table = t[:, :, 0]                                               # (256, 256)

    # Bias part: conv stack applied to the all-zero input.
    z = jnp.zeros((1, EMB, L), f32)
    z = _conv1d(z, params["conv1_w"], params["conv1_b"], 2)
    z = _conv1d(z, params["conv2_w"], params["conv2_b"], 1)
    z = _conv1d(z, params["conv3_w"], params["conv3_b"], 1)
    eff_b = z[:, :, 0]                                               # (1, 256)

    # Fold the MLP's first Linear (also affine, pre-ReLU) into table / bias.
    # TODO(synk): MLPWrapper source not provided; assumed
    # Linear(dim,dim) -> ReLU -> Linear(dim,dim).
    mw1 = params["mlp_w1"].T                                         # (in, out)
    tab = table @ mw1                                                # (256, 256)
    b1 = eff_b @ mw1 + params["mlp_b1"][None, :]                     # (1, 256)
    b2 = params["mlp_b2"][None, :]                                   # (1, 256)

    return {
        "tab": tab.astype(jnp.bfloat16),                             # 128 KiB
        "w2": params["mlp_w2"].T.astype(jnp.bfloat16),               # 128 KiB
        "bias": jnp.concatenate([b1, b2], axis=1).astype(f32),       # (1, 512)
    }


# ---------------- forward ----------------

def curve_encoder_forward(kparams, curve_magnitude, curve_shape):
    # ins == 'shape' branch: curve_magnitude is unused (matches the PyTorch module)
    del curve_magnitude

    # CurveEncoder: curve_shape.transpose(-2, -1): (B, L, 1) -> (B, 1, L)
    cs = jnp.swapaxes(curve_shape, -2, -1)
    assert cs.shape[1] == 1
    B, _, L = cs.shape
    fused, Bp = _build_fused_forward(B, L)

    # Digitized bins -> int indices (the reference calls .long(); clip is a
    # safety guard only).  Per curve, the multi-hot target at lane
    # l*N_BINS + k is the flat index l*N_BINS + idx[b, l].
    idx = jnp.clip(cs[:, 0, :].astype(jnp.int32), 0, N_BINS - 1)           # (B, L)
    flat = idx + (jnp.arange(L, dtype=jnp.int32) * N_BINS)[None, :]        # (B, L)
    tgt = jnp.repeat(flat, N_BINS, axis=1)                                 # (B, L*N_BINS)
    tgt_pad = jnp.full((Bp, L * N_BINS), -1, jnp.int32).at[:B].set(tgt)    # pad rows never match

    out = fused(tgt_pad, kparams["tab"], kparams["w2"], kparams["bias"])
    return out[:B]                                                         # (B, DIM)


def reference_forward(params, curve_magnitude, curve_shape):
    """Pure-JAX f32 reference of the same forward (for a sanity check)."""
    del curve_magnitude
    cs = jnp.swapaxes(curve_shape, -2, -1)
    idx = jnp.clip(cs[:, 0, :].astype(jnp.int32), 0, N_BINS - 1)     # (B, L)
    emb = params["embedding"][idx] * EMB_SCALE                       # (B, L, 8)
    x = jnp.swapaxes(emb, 1, 2)                                      # (B, 8, L)
    x = _conv1d(x, params["conv1_w"], params["conv1_b"], 2)
    x = _conv1d(x, params["conv2_w"], params["conv2_b"], 1)
    x = _conv1d(x, params["conv3_w"], params["conv3_b"], 1)
    s = x[:, :, 0]                                                   # (B, 256)
    h = jnp.maximum(s @ params["mlp_w1"].T + params["mlp_b1"], 0.0)
    return h @ params["mlp_w2"].T + params["mlp_b2"]


if __name__ == "__main__":
    key = jax.random.PRNGKey(0)
    kp, km, ks = jax.random.split(key, 3)
    params = init_params(kp)
    kparams = prepare_params(params)

    # curve_magnitude: (B, 1)  (unused on the ins='shape' path)
    curve_magnitude = jax.random.normal(km, (BATCH, 1), jnp.float32)
    # curve_shape: (B, L, 1) digitized bin indices stored as floats
    curve_shape = jax.random.randint(
        ks, (BATCH, SEQ_LEN, 1), 0, N_BINS).astype(jnp.float32)

    fwd = jax.jit(curve_encoder_forward)
    out = fwd(kparams, curve_magnitude, curve_shape)
    out = jax.block_until_ready(out)
    assert out.shape == (BATCH, DIM) and out.dtype == jnp.float32

    # Sanity check vs. the f32 reference (kernel uses bf16 weights -> loose tol).
    ref = reference_forward(params, curve_magnitude, curve_shape)
    err = float(jnp.max(jnp.abs(out - ref)) / (jnp.max(jnp.abs(ref)) + 1e-6))
    assert err < 0.05, f"mismatch vs reference: rel-max err {err}"

    print("KERNEL_OK")
</pallas_src>

<mosaic_0001>
module attributes {stable_mosaic.version = 11 : i64} {
  func.func @kernel(%arg0: i32, %arg1: memref<8x256xi32, #tpu.memory_space<vmem>>, %arg2: memref<256x256xbf16, #tpu.memory_space<vmem>>, %arg3: memref<256x256xbf16, #tpu.memory_space<vmem>>, %arg4: memref<1x512xf32, #tpu.memory_space<vmem>>, %arg5: memref<8x256xf32, #tpu.memory_space<vmem>>) attributes {dimension_semantics = [#tpu.dimension_semantics<parallel>], iteration_bounds = array<i64: 1>, scalar_prefetch = 0 : i64, scratch_operands = 0 : i64, tpu.core_type = #tpu.core_type<tc>, window_params = [{transform_indices = @transform_0, window_bounds = array<i64: 8, 256>}, {pipeline_mode = #tpu.pipeline_mode<synchronous>, transform_indices = @transform_1, window_bounds = array<i64: 256, 256>}, {pipeline_mode = #tpu.pipeline_mode<synchronous>, transform_indices = @transform_2, window_bounds = array<i64: 256, 256>}, {pipeline_mode = #tpu.pipeline_mode<synchronous>, transform_indices = @transform_3, window_bounds = array<i64: 1, 512>}, {transform_indices = @transform_4, window_bounds = array<i64: 8, 256>}]} {
    %0 = tpu.iota {dimensions = array<i32: 1>} : vector<8x256xi32>
    %c0 = arith.constant 0 : index
    %c0_0 = arith.constant 0 : index
    %1 = vector.load %arg1[%c0, %c0_0] : memref<8x256xi32, #tpu.memory_space<vmem>>, vector<8x256xi32>
    %2 = arith.cmpi eq, %0, %1 : vector<8x256xi32>
    %3 = arith.extui %2 : vector<8x256xi1> to vector<8x256xi32>
    %4 = arith.sitofp %3 : vector<8x256xi32> to vector<8x256xf32>
    %5 = arith.truncf %4 : vector<8x256xf32> to vector<8x256xbf16>
    %c0_1 = arith.constant 0 : index
    %c0_2 = arith.constant 0 : index
    %6 = vector.load %arg4[%c0_1, %c0_2] : memref<1x512xf32, #tpu.memory_space<vmem>>, vector<1x256xf32>
    %c0_3 = arith.constant 0 : index
    %c256 = arith.constant 256 : index
    %7 = vector.load %arg4[%c0_3, %c256] : memref<1x512xf32, #tpu.memory_space<vmem>>, vector<1x256xf32>
    %c0_4 = arith.constant 0 : index
    %c0_5 = arith.constant 0 : index
    %8 = vector.load %arg2[%c0_4, %c0_5] : memref<256x256xbf16, #tpu.memory_space<vmem>>, vector<256x256xbf16>
    %cst = arith.constant dense<0.000000e+00> : vector<8x256xf32>
    %9 = tpu.matmul %5, %8, %cst {dimension_numbers = #tpu.dot_dimension_numbers<[1], [0], [0], [1], [0, 0, 1, 1], [], []>} : vector<8x256xbf16>, vector<256x256xbf16>, vector<8x256xf32> -> vector<8x256xf32>
    %10 = vector.broadcast %6 : vector<1x256xf32> to vector<8x256xf32>
    %11 = arith.addf %9, %10 : vector<8x256xf32>
    %cst_6 = arith.constant 0.000000e+00 : f32
    %12 = vector.broadcast %cst_6 : f32 to vector<8x256xf32>
    %13 = arith.maximumf %11, %12 : vector<8x256xf32>
    %14 = arith.truncf %13 : vector<8x256xf32> to vector<8x256xbf16>
    %c0_7 = arith.constant 0 : index
    %c0_8 = arith.constant 0 : index
    %15 = vector.load %arg3[%c0_7, %c0_8] : memref<256x256xbf16, #tpu.memory_space<vmem>>, vector<256x256xbf16>
    %cst_9 = arith.constant dense<0.000000e+00> : vector<8x256xf32>
    %16 = tpu.matmul %14, %15, %cst_9 {dimension_numbers = #tpu.dot_dimension_numbers<[1], [0], [0], [1], [0, 0, 1, 1], [], []>} : vector<8x256xbf16>, vector<256x256xbf16>, vector<8x256xf32> -> vector<8x256xf32>
    %17 = vector.broadcast %7 : vector<1x256xf32> to vector<8x256xf32>
    %18 = arith.addf %16, %17 : vector<8x256xf32>
    %c0_10 = arith.constant 0 : index
    %c0_11 = arith.constant 0 : index
    %19 = vector.load %arg5[%c0_10, %c0_11] : memref<8x256xf32, #tpu.memory_space<vmem>>, vector<8x256xf32>
    tpu.vector_store %arg5[%c0_10, %c0_11], %18 {strides = array<i32>} : memref<8x256xf32, #tpu.memory_space<vmem>>, vector<8x256xf32>,
    return
  }
  func.func @transform_0(%arg0: i32) -> (i32, i32) {
    %c0_i32 = arith.constant 0 : i32
    %c0_i32_0 = arith.constant 0 : i32
    return %arg0, %c0_i32 : i32, i32
  }
  func.func @transform_1(%arg0: i32) -> (i32, i32) {
    %c0_i32 = arith.constant 0 : i32
    %c0_i32_0 = arith.constant 0 : i32
    %c0_i32_1 = arith.constant 0 : i32
    return %c0_i32, %c0_i32_0 : i32, i32
  }
  func.func @transform_2(%arg0: i32) -> (i32, i32) {
    %c0_i32 = arith.constant 0 : i32
    %c0_i32_0 = arith.constant 0 : i32
    %c0_i32_1 = arith.constant 0 : i32
    return %c0_i32, %c0_i32_0 : i32, i32
  }
  func.func @transform_3(%arg0: i32) -> (i32, i32) {
    %c0_i32 = arith.constant 0 : i32
    %c0_i32_0 = arith.constant 0 : i32
    %c0_i32_1 = arith.constant 0 : i32
    return %c0_i32, %c0_i32_0 : i32, i32
  }
  func.func @transform_4(%arg0: i32) -> (i32, i32) {
    %c0_i32 = arith.constant 0 : i32
    %c0_i32_0 = arith.constant 0 : i32
    return %arg0, %c0_i32 : i32, i32
  }
}

</mosaic_0001>

<llo_original>
// kernel: curve_encoder_forward.1
$region0: #{curve_encoder_forward.1}
  #allocation0 [shape = 'u32[]', space=smem, size = 0x4, offset = 0x4, fixed_abs, tag = 'smem constant byte address 0x4 - core index']
  #allocation1 [shape = 'u32[144,128]{1,0:T(1,128)}', space=vmem, size = 0x12000, scoped, tag = 'internal scratch']
  %s0 = inlined_call_operand.vmem [shape: s32[8,256], index: 0, kind: input, shape index: {}]
  %s1 = inlined_call_operand.hbm [shape: bf16[256,256], index: 1, kind: input, shape index: {}]
  %s2 = inlined_call_operand.hbm [shape: bf16[256,256], index: 2, kind: input, shape index: {}]
  %s3 = inlined_call_operand.vmem [shape: f32[1,512], index: 3, kind: input, shape index: {}]
  %s4 = inlined_call_operand.vmem [shape: f32[8,256], index: 4, kind: output, shape index: {}]
  %s5 = sld [smem:[#allocation0]]
  $region34: #{curve_encoder_forward.1} parent=0
    _
  %s7 = ssub.s32 1, %s5
  %s8 = scalar_select 0, %s7, %s5
  $region1: #{curve_encoder_forward.1} parent=0
    #allocation2 [shape = 'u8[131072]{0}', space=vmem, size = 0x20000, scoped, tag = 'input window, operand 1, single buffered']
    #allocation3 [shape = 's32[1]{0}', space=sflag, size = 0x4, scoped, tag = 'scoped memory for curve_encoder_forward.1']
    #allocation4 [shape = 'u8[131072]{0}', space=vmem, size = 0x20000, scoped, tag = 'input window, operand 2, single buffered']
    #allocation5 [shape = 's32[1]{0}', space=sflag, size = 0x4, scoped, tag = 'scoped memory for curve_encoder_forward.1']
    %9 = vsyncpa [#allocation3], 0
    %10 = vsyncpa [#allocation5], 0
    // Predicated region
    $region2: #{curve_encoder_forward.1} parent=1 // pred_check
      _
    $region3: #{curve_encoder_forward.1} parent=1 // pred_check_branch
      %12 = sbr.rel (0) target = $region5
    $region4: #{curve_encoder_forward.1} parent=1 // pred_region
      _
    $region5: #{curve_encoder_forward.1} parent=1 // pred_fallthru
      _
    // Predicated region
    $region6: #{curve_encoder_forward.1} parent=1 // pred_check
      _
    $region7: #{curve_encoder_forward.1} parent=1 // pred_check_branch
      %14 = sbr.rel (0) target = $region9
    $region8: #{curve_encoder_forward.1} parent=1 // pred_region
      %s16 = ssub.s32 4096, 4096
      %17 = vsyncadd [#allocation3], %s16
      %s18 = sshll.u32 [#allocation2], 4
      %s19 = int_to_ptr.vmem [resolvable:$true] %s18
      %24 = dma.hbm_to_vmem [thread:$0]  %s1, 4096, %s19, [#allocation3], 128, 128, 8
    $region9: #{curve_encoder_forward.1} parent=1 // pred_fallthru
      _
    // Predicated region
    $region10: #{curve_encoder_forward.1} parent=1 // pred_check
      _
    $region11: #{curve_encoder_forward.1} parent=1 // pred_check_branch
      %26 = sbr.rel (0) target = $region13
    $region12: #{curve_encoder_forward.1} parent=1 // pred_region
      %s28 = ssub.s32 4096, 4096
      %29 = vsyncadd [#allocation5], %s28
      %s30 = sshll.u32 [#allocation4], 4
      %s31 = int_to_ptr.vmem [resolvable:$true] %s30
      %36 = dma.hbm_to_vmem [thread:$0]  %s2, 4096, %s31, [#allocation5], 128, 128, 8
    $region13: #{curve_encoder_forward.1} parent=1 // pred_fallthru
      _
    // Predicated region
    $region14: #{curve_encoder_forward.1} parent=1 // pred_check
      _
    $region15: #{curve_encoder_forward.1} parent=1 // pred_check_branch
      %38 = sbr.rel (0) target = $region17
    $region16: #{curve_encoder_forward.1} parent=1 // pred_region
      _
    $region17: #{curve_encoder_forward.1} parent=1 // pred_fallthru
      _
    // Predicated region
    $region18: #{curve_encoder_forward.1} parent=1 // pred_check
      _
    $region19: #{curve_encoder_forward.1} parent=1 // pred_check_branch
      %40 = sbr.rel (0) target = $region21
    $region20: #{curve_encoder_forward.1} parent=1 // pred_region
      %41 = dma.done [#allocation3], 4096
    $region21: #{curve_encoder_forward.1} parent=1 // pred_fallthru
      _
    // Predicated region
    $region22: #{curve_encoder_forward.1} parent=1 // pred_check
      _
    $region23: #{curve_encoder_forward.1} parent=1 // pred_check_branch
      %43 = sbr.rel (0) target = $region25
    $region24: #{curve_encoder_forward.1} parent=1 // pred_region
      %44 = dma.done [#allocation5], 4096
    $region25: #{curve_encoder_forward.1} parent=1 // pred_fallthru
      _
    %v45 = vlaneseq
    %v46 = vand.u32 %v45, 127
    %v47 = vadd.s32 %v46, 128
    %v48 = vld [vmem:[%s0] sm:$0xff]
    %v49 = vld [vmem:[%s0 + $0x8] sm:$0xff]
    %vm50 = vcmp.eq.s32.totalorder %v46, %v48
    %vm51 = vcmp.eq.s32.totalorder %v47, %v49
    %v52 = vsel %vm50, 1, 0
    %v53 = vsel %vm51, 1, 0
    %v54 = vcvt.s32.f32 %v52
    %v55 = vcvt.s32.f32 %v53
    %v56 = vpack.c.bf16 %v54, %v54
    %v57 = vpack.c.bf16 %v55, %v55
    %v58 = vld [vmem:[%s3] sm:$0x3]
    %v59 = vld [vmem:[%s3 + $0x2] sm:$0x3]
    %v60 = vld [vmem:[#allocation2] sm:$0xff]
    %v61 = vld [vmem:[#allocation2 + $0x8] sm:$0xff]
    %v62 = vld [vmem:[#allocation2 + $0x10] sm:$0xff]
    %v63 = vld [vmem:[#allocation2 + $0x18] sm:$0xff]
    %v64 = vld [vmem:[#allocation2 + $0x20] sm:$0xff]
    %v65 = vld [vmem:[#allocation2 + $0x28] sm:$0xff]
    %v66 = vld [vmem:[#allocation2 + $0x30] sm:$0xff]
    %v67 = vld [vmem:[#allocation2 + $0x38] sm:$0xff]
    %v68 = vld [vmem:[#allocation2 + $0x40] sm:$0xff]
    %v69 = vld [vmem:[#allocation2 + $0x48] sm:$0xff]
    %v70 = vld [vmem:[#allocation2 + $0x50] sm:$0xff]
    %v71 = vld [vmem:[#allocation2 + $0x58] sm:$0xff]
    %v72 = vld [vmem:[#allocation2 + $0x60] sm:$0xff]
    %v73 = vld [vmem:[#allocation2 + $0x68] sm:$0xff]
    %v74 = vld [vmem:[#allocation2 + $0x70] sm:$0xff]
    %v75 = vld [vmem:[#allocation2 + $0x78] sm:$0xff]
    %v76 = vld [vmem:[#allocation2 + $0x80] sm:$0xff]
    %v77 = vld [vmem:[#allocation2 + $0x88] sm:$0xff]
    %v78 = vld [vmem:[#allocation2 + $0x90] sm:$0xff]
    %v79 = vld [vmem:[#allocation2 + $0x98] sm:$0xff]
    %v80 = vld [vmem:[#allocation2 + $0xa0] sm:$0xff]
    %v81 = vld [vmem:[#allocation2 + $0xa8] sm:$0xff]
    %v82 = vld [vmem:[#allocation2 + $0xb0] sm:$0xff]
    %v83 = vld [vmem:[#allocation2 + $0xb8] sm:$0xff]
    %v84 = vld [vmem:[#allocation2 + $0xc0] sm:$0xff]
    %v85 = vld [vmem:[#allocation2 + $0xc8] sm:$0xff]
    %v86 = vld [vmem:[#allocation2 + $0xd0] sm:$0xff]
    %v87 = vld [vmem:[#allocation2 + $0xd8] sm:$0xff]
    %v88 = vld [vmem:[#allocation2 + $0xe0] sm:$0xff]
    %v89 = vld [vmem:[#allocation2 + $0xe8] sm:$0xff]
    %v90 = vld [vmem:[#allocation2 + $0xf0] sm:$0xff]
    %v91 = vld [vmem:[#allocation2 + $0xf8] sm:$0xff]
    %v93 = vlaneseq
    %v94 = vshrl.u32 %v93, 7
    %v95 = vsub.s32 0, %v94
    %v96 = vrot.slane %v58, %v95
    %v97 = vlaneseq
    %v98 = vshrl.u32 %v97, 7
    %v99 = vsub.s32 1, %v98
    %v100 = vrot.slane %v58, %v99
    %v135 = vunpack.c.l.b16 %v60
    %v136 = vunpack.c.h.b16 %v60
    %v137 = vunpack.c.l.b16 %v61
    %v138 = vunpack.c.h.b16 %v61
    %v139 = vunpack.c.l.b16 %v62
    %v140 = vunpack.c.h.b16 %v62
    %v141 = vunpack.c.l.b16 %v63
    %v142 = vunpack.c.h.b16 %v63
    %v143 = vunpack.c.l.b16 %v64
    %v144 = vunpack.c.h.b16 %v64
    %v145 = vunpack.c.l.b16 %v65
    %v146 = vunpack.c.h.b16 %v65
    %v147 = vunpack.c.l.b16 %v66
    %v148 = vunpack.c.h.b16 %v66
    %v149 = vunpack.c.l.b16 %v67
    %v150 = vunpack.c.h.b16 %v67
    %v151 = vunpack.c.l.b16 %v68
    %v152 = vunpack.c.h.b16 %v68
    %v153 = vunpack.c.l.b16 %v69
    %v154 = vunpack.c.h.b16 %v69
    %v155 = vunpack.c.l.b16 %v70
    %v156 = vunpack.c.h.b16 %v70
    %v157 = vunpack.c.l.b16 %v71
    %v158 = vunpack.c.h.b16 %v71
    %v159 = vunpack.c.l.b16 %v72
    %v160 = vunpack.c.h.b16 %v72
    %v161 = vunpack.c.l.b16 %v73
    %v162 = vunpack.c.h.b16 %v73
    %v163 = vunpack.c.l.b16 %v74
    %v164 = vunpack.c.h.b16 %v74
    %v165 = vunpack.c.l.b16 %v75
    %v166 = vunpack.c.h.b16 %v75
    %v167 = vunpack.c.l.b16 %v76
    %v168 = vunpack.c.h.b16 %v76
    %v169 = vunpack.c.l.b16 %v77
    %v170 = vunpack.c.h.b16 %v77
    %v171 = vunpack.c.l.b16 %v78
    %v172 = vunpack.c.h.b16 %v78
    %v173 = vunpack.c.l.b16 %v79
    %v174 = vunpack.c.h.b16 %v79
    %v175 = vunpack.c.l.b16 %v80
    %v176 = vunpack.c.h.b16 %v80
    %v177 = vunpack.c.l.b16 %v81
    %v178 = vunpack.c.h.b16 %v81
    %v179 = vunpack.c.l.b16 %v82
    %v180 = vunpack.c.h.b16 %v82
    %v181 = vunpack.c.l.b16 %v83
    %v182 = vunpack.c.h.b16 %v83
    %v183 = vunpack.c.l.b16 %v84
    %v184 = vunpack.c.h.b16 %v84
    %v185 = vunpack.c.l.b16 %v85
    %v186 = vunpack.c.h.b16 %v85
    %v187 = vunpack.c.l.b16 %v86
    %v188 = vunpack.c.h.b16 %v86
    %v189 = vunpack.c.l.b16 %v87
    %v190 = vunpack.c.h.b16 %v87
    %v191 = vunpack.c.l.b16 %v88
    %v192 = vunpack.c.h.b16 %v88
    %v193 = vunpack.c.l.b16 %v89
    %v194 = vunpack.c.h.b16 %v89
    %v195 = vunpack.c.l.b16 %v90
    %v196 = vunpack.c.h.b16 %v90
    %v197 = vunpack.c.l.b16 %v91
    %v198 = vunpack.c.h.b16 %v91
    %v199 = vpack.c.b16 %v137, %v135
    %v200 = vpack.c.b16 %v138, %v136
    %v201 = vpack.c.b16 %v141, %v139
    %v202 = vpack.c.b16 %v142, %v140
    %v203 = vpack.c.b16 %v145, %v143
    %v204 = vpack.c.b16 %v146, %v144
    %v205 = vpack.c.b16 %v149, %v147
    %v206 = vpack.c.b16 %v150, %v148
    %v207 = vpack.c.b16 %v153, %v151
    %v208 = vpack.c.b16 %v154, %v152
    %v209 = vpack.c.b16 %v157, %v155
    %v210 = vpack.c.b16 %v158, %v156
    %v211 = vpack.c.b16 %v161, %v159
    %v212 = vpack.c.b16 %v162, %v160
    %v213 = vpack.c.b16 %v165, %v163
    %v214 = vpack.c.b16 %v166, %v164
    %v215 = vpack.c.b16 %v169, %v167
    %v216 = vpack.c.b16 %v170, %v168
    %v217 = vpack.c.b16 %v173, %v171
    %v218 = vpack.c.b16 %v174, %v172
    %v219 = vpack.c.b16 %v177, %v175
    %v220 = vpack.c.b16 %v178, %v176
    %v221 = vpack.c.b16 %v181, %v179
    %v222 = vpack.c.b16 %v182, %v180
    %v223 = vpack.c.b16 %v185, %v183
    %v224 = vpack.c.b16 %v186, %v184
    %v225 = vpack.c.b16 %v189, %v187
    %v226 = vpack.c.b16 %v190, %v188
    %v227 = vpack.c.b16 %v193, %v191
    %v228 = vpack.c.b16 %v194, %v192
    %v229 = vpack.c.b16 %v197, %v195
    %v230 = vpack.c.b16 %v198, %v196
    %263 = vmatprep.subr.bf16.mxu0 %v200
    %264 = vmatpush1.bf16.msra.mxu0 %v199
    %265 = vmatprep.subr.bf16.mxu0 %v202
    %266 = vmatpush1.bf16.msra.mxu0 %v201
    %267 = vmatprep.subr.bf16.mxu0 %v204
    %268 = vmatpush1.bf16.msra.mxu0 %v203
    %269 = vmatprep.subr.bf16.mxu0 %v206
    %270 = vmatpush1.bf16.msra.mxu0 %v205
    %271 = vmatprep.subr.bf16.mxu0 %v208
    %272 = vmatpush1.bf16.msra.mxu0 %v207
    %273 = vmatprep.subr.bf16.mxu0 %v210
    %274 = vmatpush1.bf16.msra.mxu0 %v209
    %275 = vmatprep.subr.bf16.mxu0 %v212
    %276 = vmatpush1.bf16.msra.mxu0 %v211
    %277 = vmatprep.subr.bf16.mxu0 %v214
    %278 = vmatpush1.bf16.msra.mxu0 %v213
    %279 = vmatprep.subr.bf16.mxu0 %v216
    %280 = vmatpush1.bf16.msra.mxu0 %v215
    %281 = vmatprep.subr.bf16.mxu0 %v218
    %282 = vmatpush1.bf16.msra.mxu0 %v217
    %283 = vmatprep.subr.bf16.mxu0 %v220
    %284 = vmatpush1.bf16.msra.mxu0 %v219
    %285 = vmatprep.subr.bf16.mxu0 %v222
    %286 = vmatpush1.bf16.msra.mxu0 %v221
    %287 = vmatprep.subr.bf16.mxu0 %v224
    %288 = vmatpush1.bf16.msra.mxu0 %v223
    %289 = vmatprep.subr.bf16.mxu0 %v226
    %290 = vmatpush1.bf16.msra.mxu0 %v225
    %291 = vmatprep.subr.bf16.mxu0 %v228
    %292 = vmatpush1.bf16.msra.mxu0 %v227
    %293 = vmatprep.subr.bf16.mxu0 %v230
    %294 = vmatpush1.bf16.msra.mxu0 %v229
    %295 = vmatprep.mubr.bf16.mxu0 %v57
    %296 = vmatmul.mubr.bf16.gmra.mrb[0].mxu0 %v56
    %v297 = vpop.f32.mrb[0].mxu0
    %v298 = vadd.f32 %v96, %v297
    %v299 = vpop.f32.mrb[0].mxu0
    %v300 = vadd.f32 %v100, %v299
    %v301 = vpop.f32.mrb[0].mxu0
    %v302 = vpop.f32.mrb[0].mxu0
    %303 = vdwg.mxu0
    %v304 = vmax.f32 %v298, 0.0
    %v305 = vmax.f32 %v300, 0.0
    %v306 = vpack.c.bf16 %v304, %v304
    %v307 = vpack.c.bf16 %v305, %v305
    %v308 = vld [vmem:[#allocation4] sm:$0xff]
    %v309 = vld [vmem:[#allocation4 + $0x8] sm:$0xff]
    %v310 = vld [vmem:[#allocation4 + $0x10] sm:$0xff]
    %v311 = vld [vmem:[#allocation4 + $0x18] sm:$0xff]
    %v312 = vld [vmem:[#allocation4 + $0x20] sm:$0xff]
    %v313 = vld [vmem:[#allocation4 + $0x28] sm:$0xff]
    %v314 = vld [vmem:[#allocation4 + $0x30] sm:$0xff]
    %v315 = vld [vmem:[#allocation4 + $0x38] sm:$0xff]
    %v316 = vld [vmem:[#allocation4 + $0x40] sm:$0xff]
    %v317 = vld [vmem:[#allocation4 + $0x48] sm:$0xff]
    %v318 = vld [vmem:[#allocation4 + $0x50] sm:$0xff]
    %v319 = vld [vmem:[#allocation4 + $0x58] sm:$0xff]
    %v320 = vld [vmem:[#allocation4 + $0x60] sm:$0xff]
    %v321 = vld [vmem:[#allocation4 + $0x68] sm:$0xff]
    %v322 = vld [vmem:[#allocation4 + $0x70] sm:$0xff]
    %v323 = vld [vmem:[#allocation4 + $0x78] sm:$0xff]
    %v324 = vld [vmem:[#allocation4 + $0x80] sm:$0xff]
    %v325 = vld [vmem:[#allocation4 + $0x88] sm:$0xff]
    %v326 = vld [vmem:[#allocation4 + $0x90] sm:$0xff]
    %v327 = vld [vmem:[#allocation4 + $0x98] sm:$0xff]
    %v328 = vld [vmem:[#allocation4 + $0xa0] sm:$0xff]
    %v329 = vld [vmem:[#allocation4 + $0xa8] sm:$0xff]
    %v330 = vld [vmem:[#allocation4 + $0xb0] sm:$0xff]
    %v331 = vld [vmem:[#allocation4 + $0xb8] sm:$0xff]
    %v332 = vld [vmem:[#allocation4 + $0xc0] sm:$0xff]
    %v333 = vld [vmem:[#allocation4 + $0xc8] sm:$0xff]
    %v334 = vld [vmem:[#allocation4 + $0xd0] sm:$0xff]
    %v335 = vld [vmem:[#allocation4 + $0xd8] sm:$0xff]
    %v336 = vld [vmem:[#allocation4 + $0xe0] sm:$0xff]
    %v337 = vld [vmem:[#allocation4 + $0xe8] sm:$0xff]
    %v338 = vld [vmem:[#allocation4 + $0xf0] sm:$0xff]
    %v339 = vld [vmem:[#allocation4 + $0xf8] sm:$0xff]
    %v341 = vlaneseq
    %v342 = vshrl.u32 %v341, 7
    %v343 = vsub.s32 0, %v342
    %v344 = vrot.slane %v59, %v343
    %v345 = vlaneseq
    %v346 = vshrl.u32 %v345, 7
    %v347 = vsub.s32 1, %v346
    %v348 = vrot.slane %v59, %v347
    %v383 = vunpack.c.l.b16 %v308
    %v384 = vunpack.c.h.b16 %v308
    %v385 = vunpack.c.l.b16 %v309
    %v386 = vunpack.c.h.b16 %v309
    %v387 = vunpack.c.l.b16 %v310
    %v388 = vunpack.c.h.b16 %v310
    %v389 = vunpack.c.l.b16 %v311
    %v390 = vunpack.c.h.b16 %v311
    %v391 = vunpack.c.l.b16 %v312
    %v392 = vunpack.c.h.b16 %v312
    %v393 = vunpack.c.l.b16 %v313
    %v394 = vunpack.c.h.b16 %v313
    %v395 = vunpack.c.l.b16 %v314
    %v396 = vunpack.c.h.b16 %v314
    %v397 = vunpack.c.l.b16 %v315
    %v398 = vunpack.c.h.b16 %v315
    %v399 = vunpack.c.l.b16 %v316
    %v400 = vunpack.c.h.b16 %v316
    %v401 = vunpack.c.l.b16 %v317
    %v402 = vunpack.c.h.b16 %v317
    %v403 = vunpack.c.l.b16 %v318
    %v404 = vunpack.c.h.b16 %v318
    %v405 = vunpack.c.l.b16 %v319
    %v406 = vunpack.c.h.b16 %v319
    %v407 = vunpack.c.l.b16 %v320
    %v408 = vunpack.c.h.b16 %v320
    %v409 = vunpack.c.l.b16 %v321
    %v410 = vunpack.c.h.b16 %v321
    %v411 = vunpack.c.l.b16 %v322
    %v412 = vunpack.c.h.b16 %v322
    %v413 = vunpack.c.l.b16 %v323
    %v414 = vunpack.c.h.b16 %v323
    %v415 = vunpack.c.l.b16 %v324
    %v416 = vunpack.c.h.b16 %v324
    %v417 = vunpack.c.l.b16 %v325
    %v418 = vunpack.c.h.b16 %v325
    %v419 = vunpack.c.l.b16 %v326
    %v420 = vunpack.c.h.b16 %v326
    %v421 = vunpack.c.l.b16 %v327
    %v422 = vunpack.c.h.b16 %v327
    %v423 = vunpack.c.l.b16 %v328
    %v424 = vunpack.c.h.b16 %v328
    %v425 = vunpack.c.l.b16 %v329
    %v426 = vunpack.c.h.b16 %v329
    %v427 = vunpack.c.l.b16 %v330
    %v428 = vunpack.c.h.b16 %v330
    %v429 = vunpack.c.l.b16 %v331
    %v430 = vunpack.c.h.b16 %v331
    %v431 = vunpack.c.l.b16 %v332
    %v432 = vunpack.c.h.b16 %v332
    %v433 = vunpack.c.l.b16 %v333
    %v434 = vunpack.c.h.b16 %v333
    %v435 = vunpack.c.l.b16 %v334
    %v436 = vunpack.c.h.b16 %v334
    %v437 = vunpack.c.l.b16 %v335
    %v438 = vunpack.c.h.b16 %v335
    %v439 = vunpack.c.l.b16 %v336
    %v440 = vunpack.c.h.b16 %v336
    %v441 = vunpack.c.l.b16 %v337
    %v442 = vunpack.c.h.b16 %v337
    %v443 = vunpack.c.l.b16 %v338
    %v444 = vunpack.c.h.b16 %v338
    %v445 = vunpack.c.l.b16 %v339
    %v446 = vunpack.c.h.b16 %v339
    %v447 = vpack.c.b16 %v385, %v383
    %v448 = vpack.c.b16 %v386, %v384
    %v449 = vpack.c.b16 %v389, %v387
    %v450 = vpack.c.b16 %v390, %v388
    %v451 = vpack.c.b16 %v393, %v391
    %v452 = vpack.c.b16 %v394, %v392
    %v453 = vpack.c.b16 %v397, %v395
    %v454 = vpack.c.b16 %v398, %v396
    %v455 = vpack.c.b16 %v401, %v399
    %v456 = vpack.c.b16 %v402, %v400
    %v457 = vpack.c.b16 %v405, %v403
    %v458 = vpack.c.b16 %v406, %v404
    %v459 = vpack.c.b16 %v409, %v407
    %v460 = vpack.c.b16 %v410, %v408
    %v461 = vpack.c.b16 %v413, %v411
    %v462 = vpack.c.b16 %v414, %v412
    %v463 = vpack.c.b16 %v417, %v415
    %v464 = vpack.c.b16 %v418, %v416
    %v465 = vpack.c.b16 %v421, %v419
    %v466 = vpack.c.b16 %v422, %v420
    %v467 = vpack.c.b16 %v425, %v423
    %v468 = vpack.c.b16 %v426, %v424
    %v469 = vpack.c.b16 %v429, %v427
    %v470 = vpack.c.b16 %v430, %v428
    %v471 = vpack.c.b16 %v433, %v431
    %v472 = vpack.c.b16 %v434, %v432
    %v473 = vpack.c.b16 %v437, %v435
    %v474 = vpack.c.b16 %v438, %v436
    %v475 = vpack.c.b16 %v441, %v439
    %v476 = vpack.c.b16 %v442, %v440
    %v477 = vpack.c.b16 %v445, %v443
    %v478 = vpack.c.b16 %v446, %v444
    %511 = vmatprep.subr.bf16.mxu0 %v448
    %512 = vmatpush1.bf16.msra.mxu0 %v447
    %513 = vmatprep.subr.bf16.mxu0 %v450
    %514 = vmatpush1.bf16.msra.mxu0 %v449
    %515 = vmatprep.subr.bf16.mxu0 %v452
    %516 = vmatpush1.bf16.msra.mxu0 %v451
    %517 = vmatprep.subr.bf16.mxu0 %v454
    %518 = vmatpush1.bf16.msra.mxu0 %v453
    %519 = vmatprep.subr.bf16.mxu0 %v456
    %520 = vmatpush1.bf16.msra.mxu0 %v455
    %521 = vmatprep.subr.bf16.mxu0 %v458
    %522 = vmatpush1.bf16.msra.mxu0 %v457
    %523 = vmatprep.subr.bf16.mxu0 %v460
    %524 = vmatpush1.bf16.msra.mxu0 %v459
    %525 = vmatprep.subr.bf16.mxu0 %v462
    %526 = vmatpush1.bf16.msra.mxu0 %v461
    %527 = vmatprep.subr.bf16.mxu0 %v464
    %528 = vmatpush1.bf16.msra.mxu0 %v463
    %529 = vmatprep.subr.bf16.mxu0 %v466
    %530 = vmatpush1.bf16.msra.mxu0 %v465
    %531 = vmatprep.subr.bf16.mxu0 %v468
    %532 = vmatpush1.bf16.msra.mxu0 %v467
    %533 = vmatprep.subr.bf16.mxu0 %v470
    %534 = vmatpush1.bf16.msra.mxu0 %v469
    %535 = vmatprep.subr.bf16.mxu0 %v472
    %536 = vmatpush1.bf16.msra.mxu0 %v471
    %537 = vmatprep.subr.bf16.mxu0 %v474
    %538 = vmatpush1.bf16.msra.mxu0 %v473
    %539 = vmatprep.subr.bf16.mxu0 %v476
    %540 = vmatpush1.bf16.msra.mxu0 %v475
    %541 = vmatprep.subr.bf16.mxu0 %v478
    %542 = vmatpush1.bf16.msra.mxu0 %v477
    %543 = vmatprep.mubr.bf16.mxu0 %v307
    %544 = vmatmul.mubr.bf16.gmra.mrb[0].mxu0 %v306
    %v545 = vpop.f32.mrb[0].mxu0
    %v546 = vadd.f32 %v344, %v545
    %v547 = vpop.f32.mrb[0].mxu0
    %v548 = vadd.f32 %v348, %v547
    %v549 = vpop.f32.mrb[0].mxu0
    %v550 = vpop.f32.mrb[0].mxu0
    %551 = vdwg.mxu0
    %552 = vst [vmem:[%s4] sm:$0xff] %v546
    %553 = vst [vmem:[%s4 + $0x8] sm:$0xff] %v548
    // Predicated region
    $region26: #{curve_encoder_forward.1} parent=1 // pred_check
      _
    $region27: #{curve_encoder_forward.1} parent=1 // pred_check_branch
      %555 = sbr.rel (0) target = $region29
    $region28: #{curve_encoder_forward.1} parent=1 // pred_region
      _
    $region29: #{curve_encoder_forward.1} parent=1 // pred_fallthru
      _
    // Predicated region
    $region30: #{curve_encoder_forward.1} parent=1 // pred_check
      _
    $region31: #{curve_encoder_forward.1} parent=1 // pred_check_branch
      %557 = sbr.rel (0) target = $region33
    $region32: #{curve_encoder_forward.1} parent=1 // pred_region
      _
    $region33: #{curve_encoder_forward.1} parent=1 // pred_fallthru
      _
    %558 = vsyncpa [#allocation3], 1
    %559 = vsyncpa [#allocation5], 1

</llo_original>
